<compile_context>
chip_gen: v7x
topology: tpu7x:2x2x1
jax: 0.10.0
libtpu: 0.0.40
codegen_flags: <defaults>
</compile_context>

<pallas_src>
import math

import jax
import jax.numpy as jnp
from jax.experimental import pallas as pl
from jax.experimental.pallas import tpu as pltpu

_GELU_C = math.sqrt(2.0 / math.pi)


def _new_gelu(x):
    # VampNet NewGELU (tanh approximation), f32 math.
    return 0.5 * x * (1.0 + jnp.tanh(_GELU_C * (x + 0.044715 * (x * x * x))))


def _round_up(x, m):
    return -(-x // m) * m


def _vmem_capacity_bytes():
    """Physical VMEM capacity; conservative fallback if the query is unavailable."""
    try:
        cap = int(pltpu.get_tpu_info().vmem_capacity_bytes)
        if cap > 0:
            return cap
    except Exception:
        pass
    return 64 * 1024 * 1024  # v7x per-TC size; safe lower bound everywhere


# -----------------------------------------------------------------------------
# Kernels
# -----------------------------------------------------------------------------
def _ffn_kernel_resident(x_ref, w1t_ref, w2t_ref, o_ref):
    """Weights fully VMEM-resident (block_h == H): one fused step, no scratch.

    x_ref:   (block_m, d)      activation tile (native dtype)
    w1t_ref: (d, 2H)           W1^T, columns [0,H)=p1 features, [H,2H)=p2 features
    w2t_ref: (H, d)            W2^T
    o_ref:   (block_m, d)      output tile
    """
    h = jnp.dot(x_ref[...], w1t_ref[...], preferred_element_type=jnp.float32)
    hidden = w2t_ref.shape[0]
    p1 = h[:, :hidden]
    p2 = h[:, hidden:]
    gated = (p1 * _new_gelu(p2)).astype(w2t_ref.dtype)
    o_ref[...] = jnp.dot(gated, w2t_ref[...],
                         preferred_element_type=jnp.float32).astype(o_ref.dtype)


def _ffn_kernel_tiled(x_ref, w1s_ref, w2t_ref, o_ref, acc_ref):
    """Hidden axis tiled (inner grid axis k); f32 accumulator over hidden chunks.

    x_ref:   (block_m, d)
    w1s_ref: (d, 2*block_h)    restacked W1^T slab: [:block_h]=p1_k, [block_h:]=p2_k
    w2t_ref: (block_h, d)      W2^T rows for this hidden chunk
    o_ref:   (block_m, d)      written at the last k
    acc_ref: (block_m, d) f32  VMEM accumulator
    """
    k = pl.program_id(1)

    @pl.when(k == 0)
    def _():
        acc_ref[...] = jnp.zeros_like(acc_ref)

    h = jnp.dot(x_ref[...], w1s_ref[...], preferred_element_type=jnp.float32)
    bh = w2t_ref.shape[0]
    p1 = h[:, :bh]
    p2 = h[:, bh:]
    gated = (p1 * _new_gelu(p2)).astype(w2t_ref.dtype)
    acc_ref[...] += jnp.dot(gated, w2t_ref[...],
                            preferred_element_type=jnp.float32)

    @pl.when(k == pl.num_programs(1) - 1)
    def _():
        o_ref[...] = acc_ref[...].astype(o_ref.dtype)


# -----------------------------------------------------------------------------
# Wrapper
# -----------------------------------------------------------------------------
def feed_forward_gated_gelu(x, w1, w2, *, block_m=None, block_h=None):
    """VampNet FeedForwardGatedGELU forward (inference only).

    x:  (..., d_model)
    w1: (4*d_model, d_model)  torch nn.Linear layout, OR pre-transposed (d_model, 4*d_model)
    w2: (d_model, 2*d_model)  torch layout, OR pre-transposed (2*d_model, d_model)

    For best performance feed bf16 activations/weights (f32 only accumulates) and
    pass pre-transposed weights so the one-time transpose is hoisted out of the call.
    """
    d = x.shape[-1]
    H = 2 * d  # ffn_dim

    # Accept either torch (out, in) layout or pre-transposed (in, out) layout.
    if w1.shape == (d, 2 * H):
        w1t = w1
    else:
        assert w1.shape == (2 * H, d), f"bad w1 shape {w1.shape}"
        w1t = w1.T  # NOTE: hoist to parameter-prep time in a real model.
    if w2.shape == (H, d):
        w2t = w2
    else:
        assert w2.shape == (d, H), f"bad w2 shape {w2.shape}"
        w2t = w2.T

    lead = x.shape[:-1]
    M = int(math.prod(lead)) if lead else 1
    x2d = x.reshape(M, d)
    out_dtype = x.dtype

    x_is = jnp.dtype(x2d.dtype).itemsize
    w_is = jnp.dtype(w1t.dtype).itemsize
    o_is = jnp.dtype(out_dtype).itemsize

    # ---- generation-aware budget --------------------------------------------
    vmem_cap = _vmem_capacity_bytes()
    usable = int(vmem_cap * 0.8)                # ~20% headroom for Mosaic internals
    big_vmem = vmem_cap >= 96 * 1024 * 1024     # v5e/v6e-class (128 MiB, 1 TC)
    bm_cap = 1024 if big_vmem else 512          # v6e wants ~1024 rows to clear roofline
    megacore = not big_vmem                     # small-VMEM chip => 2 TCs (v7x proxy)

    def footprint(bm, bh):
        resident = bh == H
        w_bytes = 2 * 3 * bh * d * w_is         # W1 slab (d,2bh) + W2 slab (bh,d), dbl-buffered
        x_bytes = 2 * bm * d * x_is
        o_bytes = 2 * bm * d * o_is
        acc_bytes = 0 if resident else bm * d * 4
        inter = bm * 2 * bh * 4 + bm * bh * w_is  # h (f32) + gated
        return w_bytes + x_bytes + o_bytes + acc_bytes + inter

    # ---- block_m --------------------------------------------------------------
    if block_m is None:
        if M <= 256:
            block_m = M
        else:
            cap = bm_cap
            if megacore:
                # guarantee >= 2 M blocks so the "parallel" axis shards across TCs
                cap = min(cap, max(256, _round_up(pl.cdiv(M, 2), 256)))
            block_m = M if M <= cap else max(256, (cap // 256) * 256)

    bm_candidates = [block_m] + [c for c in (512, 256, 128) if c < block_m and c < M]

    # ---- block_h --------------------------------------------------------------
    if block_h is None:
        # 1) Preferred: weights fully resident (hidden axis untiled) -> W1/W2 are
        #    DMA'd from HBM exactly once (constant weight block index).
        for bm in bm_candidates:
            if footprint(bm, H) <= usable:
                block_m, block_h = bm, H
                break
        if block_h is None:
            # 2) Tile the hidden axis. Prefer the largest block_m (per-step flops
            #    per weight byte), then the largest block_h (less acc RMW traffic).
            bh_candidates = [c for c in (2048, 1024, 512, 256, 128) if H % c == 0]
            if not bh_candidates:
                bh_candidates = [H]
            chosen = None
            for bm in bm_candidates:
                for bh in bh_candidates:
                    if footprint(bm, bh) <= usable:
                        chosen = (bm, bh)
                        break
                if chosen is not None:
                    break
            if chosen is None:  # nothing fits the heuristic budget; smallest tiles
                chosen = (bm_candidates[-1], bh_candidates[-1])
            block_m, block_h = chosen
    assert H % block_h == 0, (H, block_h)

    num_m_blocks = int(pl.cdiv(M, block_m))
    num_h_blocks = H // block_h
    resident = num_h_blocks == 1

    vmem_limit = int(min(max(usable, int(footprint(block_m, block_h) * 1.2)),
                         vmem_cap - (4 << 20)))

    # ---- cost estimate (weight reads depend on the schedule) ------------------
    w_reads = 1 if resident else num_m_blocks
    cost = pl.CostEstimate(
        flops=12 * M * d * d,                   # 2*M*d*4d + 2*M*2d*d
        transcendentals=M * H,                  # one tanh per p2 element
        bytes_accessed=int(M * d * x_is
                           + w_reads * (w1t.size + w2t.size) * w_is
                           + M * d * o_is),
    )

    # ---- specs ----------------------------------------------------------------
    if resident:
        grid = (num_m_blocks,)
        # Constant weight block index => loaded once; only x/out stream per block.
        # (pipeline_mode=pl.Buffered(1) on the weight specs would halve their VMEM
        #  footprint; kept default-buffered here for maximum robustness.)
        in_specs = [
            pl.BlockSpec((block_m, d), lambda i: (i, 0)),
            pl.BlockSpec((d, 2 * H), lambda i: (0, 0)),
            pl.BlockSpec((H, d), lambda i: (0, 0)),
        ]
        out_specs = pl.BlockSpec((block_m, d), lambda i: (i, 0))
        scratch_shapes = []
        kernel = _ffn_kernel_resident
        dims = ("parallel",)
        w1_in = w1t
    else:
        # Restack W1^T so chunk k's p1 / p2 column slabs are adjacent: one DMA and
        # one MXU pass per step instead of two.
        w1_in = (w1t.reshape(d, 2, num_h_blocks, block_h)
                     .transpose(0, 2, 1, 3)
                     .reshape(d, 2 * H))
        grid = (num_m_blocks, num_h_blocks)
        in_specs = [
            pl.BlockSpec((block_m, d), lambda i, k: (i, 0)),
            pl.BlockSpec((d, 2 * block_h), lambda i, k: (0, k)),
            pl.BlockSpec((block_h, d), lambda i, k: (k, 0)),
        ]
        out_specs = pl.BlockSpec((block_m, d), lambda i, k: (i, 0))
        scratch_shapes = [pltpu.VMEM((block_m, d), jnp.float32)]
        kernel = _ffn_kernel_tiled
        dims = ("parallel", "arbitrary")

    out2d = pl.pallas_call(
        kernel,
        out_shape=jax.ShapeDtypeStruct((M, d), out_dtype),
        grid_spec=pltpu.PrefetchScalarGridSpec(
            num_scalar_prefetch=0,
            grid=grid,
            in_specs=in_specs,
            out_specs=out_specs,
            scratch_shapes=scratch_shapes,
        ),
        compiler_params=pltpu.CompilerParams(
            dimension_semantics=dims,
            vmem_limit_bytes=vmem_limit,
        ),
        cost_estimate=cost,
    )(x2d, w1_in, w2t)

    return out2d.reshape(*lead, d)


# -----------------------------------------------------------------------------
# Pure-JAX reference (mirrors the PyTorch module)
# -----------------------------------------------------------------------------
def _reference(x, w1, w2):
    h = x @ w1.T
    ffn_dim = h.shape[-1] // 2
    p1, p2 = h[..., :ffn_dim], h[..., ffn_dim:]
    g = 0.5 * p2 * (1.0 + jnp.tanh(_GELU_C * (p2 + 0.044715 * p2**3)))
    return (p1 * g) @ w2.T


if __name__ == "__main__":
    key = jax.random.PRNGKey(0)
    k_x, k_w1, k_w2, k_x2, k_w1b, k_w2b = jax.random.split(key, 6)

    # --- Case 1: module-sized toy (d_model=32) -> resident-weights path -------
    batch, seq, d_model = 2, 8, 32
    ffn_dim = d_model * 2
    x = jax.random.normal(k_x, (batch, seq, d_model), dtype=jnp.float32)
    # PyTorch nn.Linear layout: (out_features, in_features)
    w1 = 0.02 * jax.random.normal(k_w1, (ffn_dim * 2, d_model), dtype=jnp.float32)
    w2 = 0.02 * jax.random.normal(k_w2, (d_model, ffn_dim), dtype=jnp.float32)

    ref = _reference(x, w1, w2)

    out = jax.block_until_ready(feed_forward_gated_gelu(x, w1, w2))
    assert out.shape == (batch, seq, d_model)
    assert jnp.allclose(out, ref, atol=1e-3, rtol=1e-3), "f32 resident path mismatch"

    out_bf16 = jax.block_until_ready(
        feed_forward_gated_gelu(x.astype(jnp.bfloat16),
                                w1.astype(jnp.bfloat16),
                                w2.astype(jnp.bfloat16)))
    assert out_bf16.shape == (batch, seq, d_model)
    assert jnp.allclose(out_bf16.astype(jnp.float32), ref, atol=3e-2, rtol=3e-2), \
        "bf16 resident path mismatch"

    # --- Case 2: force the hidden-tiled (accumulator) path --------------------
    d2 = 128
    x2 = jax.random.normal(k_x2, (batch, seq, d2), dtype=jnp.float32)
    w1b = 0.02 * jax.random.normal(k_w1b, (4 * d2, d2), dtype=jnp.float32)
    w2b = 0.02 * jax.random.normal(k_w2b, (d2, 2 * d2), dtype=jnp.float32)
    ref2 = _reference(x2, w1b, w2b)

    out2 = jax.block_until_ready(
        feed_forward_gated_gelu(x2, w1b, w2b, block_h=128))
    assert out2.shape == (batch, seq, d2)
    assert jnp.allclose(out2, ref2, atol=1e-3, rtol=1e-3), "f32 tiled path mismatch"

    print("KERNEL_OK")
</pallas_src>

<mosaic_0001>
module attributes {stable_mosaic.version = 11 : i64} {
  func.func @_ffn_kernel_resident(%arg0: i32, %arg1: memref<16x32xf32, #tpu.memory_space<vmem>>, %arg2: memref<32x128xf32, #tpu.memory_space<vmem>>, %arg3: memref<64x32xf32, #tpu.memory_space<vmem>>, %arg4: memref<16x32xf32, #tpu.memory_space<vmem>>) attributes {dimension_semantics = [#tpu.dimension_semantics<parallel>], iteration_bounds = array<i64: 1>, scalar_prefetch = 0 : i64, scratch_operands = 0 : i64, tpu.core_type = #tpu.core_type<tc>, window_params = [{transform_indices = @transform_0, window_bounds = array<i64: 16, 32>}, {pipeline_mode = #tpu.pipeline_mode<synchronous>, transform_indices = @transform_1, window_bounds = array<i64: 32, 128>}, {pipeline_mode = #tpu.pipeline_mode<synchronous>, transform_indices = @transform_2, window_bounds = array<i64: 64, 32>}, {transform_indices = @transform_3, window_bounds = array<i64: 16, 32>}]} {
    %c0 = arith.constant 0 : index
    %c0_0 = arith.constant 0 : index
    %0 = vector.load %arg1[%c0, %c0_0] : memref<16x32xf32, #tpu.memory_space<vmem>>, vector<16x32xf32>
    %c0_1 = arith.constant 0 : index
    %c0_2 = arith.constant 0 : index
    %1 = vector.load %arg2[%c0_1, %c0_2] : memref<32x128xf32, #tpu.memory_space<vmem>>, vector<32x128xf32>
    %cst = arith.constant dense<0.000000e+00> : vector<16x128xf32>
    %2 = tpu.matmul %0, %1, %cst {dimension_numbers = #tpu.dot_dimension_numbers<[1], [0], [0], [1], [0, 0, 1, 1], [], []>} : vector<16x32xf32>, vector<32x128xf32>, vector<16x128xf32> -> vector<16x128xf32>
    %3 = vector.extract_strided_slice %2 {offsets = [0, 0], sizes = [16, 64], strides = [1, 1]} : vector<16x128xf32> to vector<16x64xf32>
    %4 = vector.extract_strided_slice %2 {offsets = [0, 64], sizes = [16, 64], strides = [1, 1]} : vector<16x128xf32> to vector<16x64xf32>
    %cst_3 = arith.constant 5.000000e-01 : f32
    %5 = vector.broadcast %cst_3 : f32 to vector<16x64xf32>
    %6 = arith.mulf %5, %4 : vector<16x64xf32>
    %7 = arith.mulf %4, %4 : vector<16x64xf32>
    %8 = arith.mulf %7, %4 : vector<16x64xf32>
    %cst_4 = arith.constant 4.471500e-02 : f32
    %9 = vector.broadcast %cst_4 : f32 to vector<16x64xf32>
    %10 = arith.mulf %9, %8 : vector<16x64xf32>
    %11 = arith.addf %4, %10 : vector<16x64xf32>
    %cst_5 = arith.constant 0.797884583 : f32
    %12 = vector.broadcast %cst_5 : f32 to vector<16x64xf32>
    %13 = arith.mulf %12, %11 : vector<16x64xf32>
    %14 = math.tanh %13 : vector<16x64xf32>
    %cst_6 = arith.constant 1.000000e+00 : f32
    %15 = vector.broadcast %cst_6 : f32 to vector<16x64xf32>
    %16 = arith.addf %15, %14 : vector<16x64xf32>
    %17 = arith.mulf %6, %16 : vector<16x64xf32>
    %18 = arith.mulf %3, %17 : vector<16x64xf32>
    %c0_7 = arith.constant 0 : index
    %c0_8 = arith.constant 0 : index
    %19 = vector.load %arg3[%c0_7, %c0_8] : memref<64x32xf32, #tpu.memory_space<vmem>>, vector<64x32xf32>
    %cst_9 = arith.constant dense<0.000000e+00> : vector<16x32xf32>
    %20 = tpu.matmul %18, %19, %cst_9 {dimension_numbers = #tpu.dot_dimension_numbers<[1], [0], [0], [1], [0, 0, 1, 1], [], []>} : vector<16x64xf32>, vector<64x32xf32>, vector<16x32xf32> -> vector<16x32xf32>
    %c0_10 = arith.constant 0 : index
    %c0_11 = arith.constant 0 : index
    %21 = vector.load %arg4[%c0_10, %c0_11] : memref<16x32xf32, #tpu.memory_space<vmem>>, vector<16x32xf32>
    tpu.vector_store %arg4[%c0_10, %c0_11], %20 {strides = array<i32>} : memref<16x32xf32, #tpu.memory_space<vmem>>, vector<16x32xf32>,
    return
  }
  func.func @transform_0(%arg0: i32) -> (i32, i32) {
    %c0_i32 = arith.constant 0 : i32
    %c0_i32_0 = arith.constant 0 : i32
    return %arg0, %c0_i32 : i32, i32
  }
  func.func @transform_1(%arg0: i32) -> (i32, i32) {
    %c0_i32 = arith.constant 0 : i32
    %c0_i32_0 = arith.constant 0 : i32
    %c0_i32_1 = arith.constant 0 : i32
    return %c0_i32, %c0_i32_0 : i32, i32
  }
  func.func @transform_2(%arg0: i32) -> (i32, i32) {
    %c0_i32 = arith.constant 0 : i32
    %c0_i32_0 = arith.constant 0 : i32
    %c0_i32_1 = arith.constant 0 : i32
    return %c0_i32, %c0_i32_0 : i32, i32
  }
  func.func @transform_3(%arg0: i32) -> (i32, i32) {
    %c0_i32 = arith.constant 0 : i32
    %c0_i32_0 = arith.constant 0 : i32
    return %arg0, %c0_i32 : i32, i32
  }
}

</mosaic_0001>

<llo_original>
// kernel: tpu_custom_call.1
$region0: #{tpu_custom_call.1}
  #allocation0 [shape = 'u32[]', space=smem, size = 0x4, offset = 0x4, fixed_abs, tag = 'smem constant byte address 0x4 - core index']
  #allocation1 [shape = 'u32[144,128]{1,0:T(1,128)}', space=vmem, size = 0x12000, scoped, tag = 'internal scratch']
  %s0 = inlined_call_operand.vmem [shape: f32[16,32], index: 0, kind: input, shape index: {}]
  %s1 = inlined_call_operand.vmem [shape: f32[32,128], index: 1, kind: input, shape index: {}]
  %s2 = inlined_call_operand.vmem [shape: f32[64,32], index: 2, kind: input, shape index: {}]
  %s3 = inlined_call_operand.hbm [shape: f32[16,32], index: 3, kind: output, shape index: {}]
  %s4 = sld [smem:[#allocation0]]
  $region22: #{tpu_custom_call.1} parent=0
    _
  %s6 = ssub.s32 1, %s4
  %s7 = scalar_select 0, %s6, %s4
  $region1: #{tpu_custom_call.1} parent=0
    #allocation2 [shape = 'u8[8192]{0}', space=vmem, size = 0x2000, scoped, tag = 'output window, operand 0, single buffered']
    #allocation3 [shape = 's32[1]{0}', space=sflag, size = 0x4, scoped, tag = 'scoped memory for tpu_custom_call.1']
    %8 = vsyncpa [#allocation3], 0
    // Predicated region
    $region2: #{tpu_custom_call.1} parent=1 // pred_check
      _
    $region3: #{tpu_custom_call.1} parent=1 // pred_check_branch
      %10 = sbr.rel (0) target = $region5
    $region4: #{tpu_custom_call.1} parent=1 // pred_region
      _
    $region5: #{tpu_custom_call.1} parent=1 // pred_fallthru
      _
    // Predicated region
    $region6: #{tpu_custom_call.1} parent=1 // pred_check
      _
    $region7: #{tpu_custom_call.1} parent=1 // pred_check_branch
      %12 = sbr.rel (0) target = $region9
    $region8: #{tpu_custom_call.1} parent=1 // pred_region
      _
    $region9: #{tpu_custom_call.1} parent=1 // pred_fallthru
      _
    // Predicated region
    $region10: #{tpu_custom_call.1} parent=1 // pred_check
      _
    $region11: #{tpu_custom_call.1} parent=1 // pred_check_branch
      %14 = sbr.rel (0) target = $region13
    $region12: #{tpu_custom_call.1} parent=1 // pred_region
      _
    $region13: #{tpu_custom_call.1} parent=1 // pred_fallthru
      _
    %v15 = vld [vmem:[%s0] sm:$0xff]
    %v16 = vld [vmem:[%s0 + $0x8] sm:$0xff]
    %v17 = vld [vmem:[%s1] sm:$0xff]
    %v18 = vld [vmem:[%s1 + $0x8] sm:$0xff]
    %v19 = vld [vmem:[%s1 + $0x10] sm:$0xff]
    %v20 = vld [vmem:[%s1 + $0x18] sm:$0xff]
    %vm21 = vcmask 261120
    %v23 = vsel %vm21, %v15, 0
    %v26 = vsel %vm21, %v16, 0
    %28 = vmatprep.subr.mxu0 0.0
    %29 = vmatpush1.msra.mxu0 %v17
    %30 = vmatprep.subr.mxu0 0.0
    %31 = vmatpush1.msra.mxu0 %v18
    %32 = vmatprep.subr.mxu0 0.0
    %33 = vmatpush1.msra.mxu0 %v19
    %34 = vmatprep.subr.mxu0 0.0
    %35 = vmatpush1.msra.mxu0 %v20
    %36 = vmatprep.subr.mxu0 0.0
    %37 = vmatpush1.msra.mxu0 0.0
    %38 = vmatprep.subr.mxu0 0.0
    %39 = vmatpush1.msra.mxu0 0.0
    %40 = vmatprep.subr.mxu0 0.0
    %41 = vmatpush1.msra.mxu0 0.0
    %42 = vmatprep.subr.mxu0 0.0
    %43 = vmatpush1.msra.mxu0 0.0
    %44 = vmatprep.subr.mxu0 0.0
    %45 = vmatpush1.msra.mxu0 0.0
    %46 = vmatprep.subr.mxu0 0.0
    %47 = vmatpush1.msra.mxu0 0.0
    %48 = vmatprep.subr.mxu0 0.0
    %49 = vmatpush1.msra.mxu0 0.0
    %50 = vmatprep.subr.mxu0 0.0
    %51 = vmatpush1.msra.mxu0 0.0
    %52 = vmatprep.subr.mxu0 0.0
    %53 = vmatpush1.msra.mxu0 0.0
    %54 = vmatprep.subr.mxu0 0.0
    %55 = vmatpush1.msra.mxu0 0.0
    %56 = vmatprep.subr.mxu0 0.0
    %57 = vmatpush1.msra.mxu0 0.0
    %58 = vmatprep.subr.mxu0 0.0
    %59 = vmatpush1.msra.mxu0 0.0
    %60 = vmatprep.subr.mxu0 0.0
    %61 = vmatpush1.msra.mxu0 0.0
    %62 = vmatprep.subr.mxu0 0.0
    %63 = vmatpush1.msra.mxu0 0.0
    %64 = vmatprep.subr.mxu0 0.0
    %65 = vmatpush1.msra.mxu0 0.0
    %66 = vmatprep.subr.mxu0 0.0
    %67 = vmatpush1.msra.mxu0 0.0
    %68 = vmatprep.subr.mxu0 0.0
    %69 = vmatpush1.msra.mxu0 0.0
    %70 = vmatprep.subr.mxu0 0.0
    %71 = vmatpush1.msra.mxu0 0.0
    %72 = vmatprep.subr.mxu0 0.0
    %73 = vmatpush1.msra.mxu0 0.0
    %74 = vmatprep.subr.mxu0 0.0
    %75 = vmatpush1.msra.mxu0 0.0
    %76 = vmatprep.subr.mxu0 0.0
    %77 = vmatpush1.msra.mxu0 0.0
    %78 = vmatprep.subr.mxu0 0.0
    %79 = vmatpush1.msra.mxu0 0.0
    %80 = vmatprep.subr.mxu0 0.0
    %81 = vmatpush1.msra.mxu0 0.0
    %82 = vmatprep.subr.mxu0 0.0
    %83 = vmatpush1.msra.mxu0 0.0
    %84 = vmatprep.subr.mxu0 0.0
    %85 = vmatpush1.msra.mxu0 0.0
    %86 = vmatprep.subr.mxu0 0.0
    %87 = vmatpush1.msra.mxu0 0.0
    %88 = vmatprep.subr.mxu0 0.0
    %89 = vmatpush1.msra.mxu0 0.0
    %90 = vmatprep.subr.mxu0 0.0
    %91 = vmatpush1.msra.mxu0 0.0
    %92 = vmatprep.mubr.f32.mxu0 0.0
    %93 = vmatmul.mubr.f32.gmra.mrb[0].mxu0 %v23
    %v94 = vpop.f32.mrb[0].mxu0
    %v95 = vadd.f32 0.0, %v94
    %v96 = vpop.f32.mrb[0].mxu0
    %97 = vmatprep.mubr.f32.mxu0 0.0
    %98 = vmatmul.mubr.f32.gmra.mrb[0].mxu0 %v26
    %v99 = vpop.f32.mrb[0].mxu0
    %v100 = vadd.f32 0.0, %v99
    %v101 = vpop.f32.mrb[0].mxu0
    %102 = vdwg.mxu0
    %v103 = vmul.f32 %v95, 0.5
    %v104 = vmul.f32 %v100, 0.5
    %v105 = vmul.f32 %v95, %v95
    %v106 = vmul.f32 %v100, %v100
    %v107 = vmul.f32 %v105, %v95
    %v108 = vmul.f32 %v106, %v100
    %v109 = vmul.f32 %v107, 0.044715
    %v110 = vmul.f32 %v108, 0.044715
    %v111 = vadd.f32 %v95, %v109
    %v112 = vadd.f32 %v100, %v110
    %v113 = vmul.f32 %v111, 0.7978846
    %v114 = vmul.f32 %v112, 0.7978846
    %v115 = vtanh.pop %v113
    %v116 = vtanh.pop %v114
    %v117 = vadd.f32 %v115, 1.0
    %v118 = vadd.f32 %v116, 1.0
    %v119 = vmul.f32 %v103, %v117
    %v120 = vmul.f32 %v104, %v118
    %123 = vrot.lane.b32.xlu0 %v119, 64
    %v124 = vpop.permute.xlu0 %123
    %125 = vrot.lane.b32.xlu0 %v120, 64
    %v126 = vpop.permute.xlu0 %125
    %v129 = vmul.f32 %v95, %v124
    %v130 = vmul.f32 %v100, %v126
    %v131 = vld [vmem:[%s2] sm:$0xff]
    %v132 = vld [vmem:[%s2 + $0x8] sm:$0xff]
    %v133 = vld [vmem:[%s2 + $0x10] sm:$0xff]
    %v134 = vld [vmem:[%s2 + $0x18] sm:$0xff]
    %v135 = vld [vmem:[%s2 + $0x20] sm:$0xff]
    %v136 = vld [vmem:[%s2 + $0x28] sm:$0xff]
    %v137 = vld [vmem:[%s2 + $0x30] sm:$0xff]
    %v138 = vld [vmem:[%s2 + $0x38] sm:$0xff]
    %vm139 = vcmask 523264
    %v141 = vsel %vm139, %v129, 0
    %v144 = vsel %vm139, %v130, 0
    %146 = vmatprep.subr.mxu0 0.0
    %147 = vmatpush1.msra.mxu0 %v131
    %148 = vmatprep.subr.mxu0 0.0
    %149 = vmatpush1.msra.mxu0 %v132
    %150 = vmatprep.subr.mxu0 0.0
    %151 = vmatpush1.msra.mxu0 %v133
    %152 = vmatprep.subr.mxu0 0.0
    %153 = vmatpush1.msra.mxu0 %v134
    %154 = vmatprep.subr.mxu0 0.0
    %155 = vmatpush1.msra.mxu0 %v135
    %156 = vmatprep.subr.mxu0 0.0
    %157 = vmatpush1.msra.mxu0 %v136
    %158 = vmatprep.subr.mxu0 0.0
    %159 = vmatpush1.msra.mxu0 %v137
    %160 = vmatprep.subr.mxu0 0.0
    %161 = vmatpush1.msra.mxu0 %v138
    %162 = vmatprep.subr.mxu0 0.0
    %163 = vmatpush1.msra.mxu0 0.0
    %164 = vmatprep.subr.mxu0 0.0
    %165 = vmatpush1.msra.mxu0 0.0
    %166 = vmatprep.subr.mxu0 0.0
    %167 = vmatpush1.msra.mxu0 0.0
    %168 = vmatprep.subr.mxu0 0.0
    %169 = vmatpush1.msra.mxu0 0.0
    %170 = vmatprep.subr.mxu0 0.0
    %171 = vmatpush1.msra.mxu0 0.0
    %172 = vmatprep.subr.mxu0 0.0
    %173 = vmatpush1.msra.mxu0 0.0
    %174 = vmatprep.subr.mxu0 0.0
    %175 = vmatpush1.msra.mxu0 0.0
    %176 = vmatprep.subr.mxu0 0.0
    %177 = vmatpush1.msra.mxu0 0.0
    %178 = vmatprep.subr.mxu0 0.0
    %179 = vmatpush1.msra.mxu0 0.0
    %180 = vmatprep.subr.mxu0 0.0
    %181 = vmatpush1.msra.mxu0 0.0
    %182 = vmatprep.subr.mxu0 0.0
    %183 = vmatpush1.msra.mxu0 0.0
    %184 = vmatprep.subr.mxu0 0.0
    %185 = vmatpush1.msra.mxu0 0.0
    %186 = vmatprep.subr.mxu0 0.0
    %187 = vmatpush1.msra.mxu0 0.0
    %188 = vmatprep.subr.mxu0 0.0
    %189 = vmatpush1.msra.mxu0 0.0
    %190 = vmatprep.subr.mxu0 0.0
    %191 = vmatpush1.msra.mxu0 0.0
    %192 = vmatprep.subr.mxu0 0.0
    %193 = vmatpush1.msra.mxu0 0.0
    %194 = vmatprep.subr.mxu0 0.0
    %195 = vmatpush1.msra.mxu0 0.0
    %196 = vmatprep.subr.mxu0 0.0
    %197 = vmatpush1.msra.mxu0 0.0
    %198 = vmatprep.subr.mxu0 0.0
    %199 = vmatpush1.msra.mxu0 0.0
    %200 = vmatprep.subr.mxu0 0.0
    %201 = vmatpush1.msra.mxu0 0.0
    %202 = vmatprep.subr.mxu0 0.0
    %203 = vmatpush1.msra.mxu0 0.0
    %204 = vmatprep.subr.mxu0 0.0
    %205 = vmatpush1.msra.mxu0 0.0
    %206 = vmatprep.subr.mxu0 0.0
    %207 = vmatpush1.msra.mxu0 0.0
    %208 = vmatprep.subr.mxu0 0.0
    %209 = vmatpush1.msra.mxu0 0.0
    %210 = vmatprep.mubr.f32.mxu0 0.0
    %211 = vmatmul.mubr.f32.gmra.mrb[0].mxu0 %v141
    %v212 = vpop.f32.mrb[0].mxu0
    %v213 = vadd.f32 0.0, %v212
    %v214 = vpop.f32.mrb[0].mxu0
    %215 = vmatprep.mubr.f32.mxu0 0.0
    %216 = vmatmul.mubr.f32.gmra.mrb[0].mxu0 %v144
    %v217 = vpop.f32.mrb[0].mxu0
    %v218 = vadd.f32 0.0, %v217
    %v219 = vpop.f32.mrb[0].mxu0
    %220 = vdwg.mxu0
    %221 = vst.msk [vmem:[#allocation2] sm:$0xff] %vm21, %v213
    %222 = vst.msk [vmem:[#allocation2 + $0x8] sm:$0xff] %vm21, %v218
    // Predicated region
    $region14: #{tpu_custom_call.1} parent=1 // pred_check
      _
    $region15: #{tpu_custom_call.1} parent=1 // pred_check_branch
      %224 = sbr.rel (0) target = $region17
    $region16: #{tpu_custom_call.1} parent=1 // pred_region
      %s226 = ssub.s32 256, 256
      %227 = vsyncadd [#allocation3], %s226
      %s228 = sshll.u32 [#allocation2], 4
      %s229 = int_to_ptr.vmem [resolvable:$true] %s228
      %234 = dma.vmem_to_hbm [thread:$0]  %s229, 256, %s3, [#allocation3], 128, 128, 8
    $region17: #{tpu_custom_call.1} parent=1 // pred_fallthru
      _
    // Predicated region
    $region18: #{tpu_custom_call.1} parent=1 // pred_check
      _
    $region19: #{tpu_custom_call.1} parent=1 // pred_check_branch
      %236 = sbr.rel (0) target = $region21
    $region20: #{tpu_custom_call.1} parent=1 // pred_region
      %237 = dma.done [#allocation3], 256
    $region21: #{tpu_custom_call.1} parent=1 // pred_fallthru
      _
    %238 = vsyncpa [#allocation3], 1

</llo_original>
